<compile_context>
chip_gen: v5e
topology: v5e:2x2
jax: 0.10.0
libtpu: 0.0.40
codegen_flags: <defaults>
</compile_context>

<pallas_src>
import math

import jax
import jax.numpy as jnp
import numpy as np
from jax.experimental import pallas as pl
from jax.experimental.pallas import tpu as pltpu

N_PROPS = 256            # proposals actually produced per image (< 1000 -> padded)
FEAT = 128               # ROI feature dim (stand-in for the 1024-d shared fc)
NUM_CLASSES = 4          # num_classes (bbox branch); cls branch has +1 for bg
NUM_OUT = 1000           # fixed output length, as in the PyTorch module
BBOX_MEANS = (0.0, 0.0, 0.0, 0.0)
BBOX_STDS = (0.1, 0.1, 0.2, 0.2)          # mmdet DeltaXYWHBBoxCoder defaults
WH_RATIO_CLIP = 16.0 / 1000.0
MAX_RATIO = abs(math.log(WH_RATIO_CLIP))
NEG_BIG = -1e30          # finite "minus infinity" for the softmax row mask


def _round_up(x, m):
    return (x + m - 1) // m * m


N_BOX_ROWS = 4 * NUM_CLASSES                        # 16 box rows (class-major x1,y1,x2,y2)
CLS_ROWS = NUM_CLASSES + 1                          # 5 class logits (incl. background)
CLS_ROWS_PAD = 8                                    # clean (8,128)-tile logits store
CLS_ROW0 = 0
CTR_ROW0 = _round_up(CLS_ROWS, 8)                   # 8  (center-delta block)
SZ_ROW0 = CTR_ROW0 + N_BOX_ROWS                     # 24 (size-delta block)
FUSED_ROWS = _round_up(SZ_ROW0 + N_BOX_ROWS, 16)    # 48 (bf16 sublane friendly)
GEO_ROWS = 8                                        # px,py,pw,ph,img_w,img_h,sfx,sfy


def _mask_rcnn_r_kernel(featT_ref, geo_ref, w_ref, b_ref, boxes_ref, logits_ref):
    # ---- fused fc_cls + fc_reg: one MXU matmul, all proposals of this grid
    # step (possibly several images) on lanes, f32 accumulation -------------
    fused = jnp.dot(w_ref[...], featT_ref[...],
                    preferred_element_type=jnp.float32) + b_ref[...]

    # ---- F.softmax(roi_outs[0], dim=-1) over the class sublanes ------------
    # Emitted as a clean 8-row tile; the 3 padding rows are masked so they
    # come out as exact zeros (unmasked full-tile vst, wrapper slices [:5]).
    row8 = jax.lax.broadcasted_iota(jnp.int32, (CLS_ROWS_PAD, 1), 0)
    cls = jnp.where(row8 < CLS_ROWS,
                    fused[CLS_ROW0:CLS_ROW0 + CLS_ROWS_PAD, :], NEG_BIG)
    m = jnp.max(cls, axis=0, keepdims=True)
    e = jnp.exp(cls - m)
    s = jnp.sum(e, axis=0, keepdims=True)
    logits_ref[...] = e * pl.reciprocal(s, approx=True)

    # ---- DeltaXYWHBBoxCoder.decode + clip + scale_boxes, one (16, L) shot --
    d_ctr = fused[CTR_ROW0:CTR_ROW0 + N_BOX_ROWS, :]   # dx/dy per box row
    d_sz = fused[SZ_ROW0:SZ_ROW0 + N_BOX_ROWS, :]      # dw/dh per box row

    px = geo_ref[0:1, :]
    py = geo_ref[1:2, :]
    pw = geo_ref[2:3, :]
    ph = geo_ref[3:4, :]
    img_w = geo_ref[4:5, :]
    img_h = geo_ref[5:6, :]
    sfx = geo_ref[6:7, :]
    sfy = geo_ref[7:8, :]

    row = jax.lax.broadcasted_iota(jnp.int32, (N_BOX_ROWS, 1), 0)
    is_x = (row % 2) == 0            # rows holding x coordinates
    is_min = (row % 4) < 2           # rows holding x1/y1 (vs x2/y2)
    half = jnp.where(is_min, -0.5, 0.5)
    pc = jnp.where(is_x, px, py)             # proposal center per row (16, L)
    ps = jnp.where(is_x, pw, ph)             # proposal size   per row (16, L)
    limit = jnp.where(is_x, img_w, img_h)    # clamp x <= W, y <= H
    sf = jnp.where(is_x, sfx, sfy)           # scale_boxes factors

    g_ctr = pc + ps * d_ctr
    g_sz = ps * jnp.exp(jnp.clip(d_sz, -MAX_RATIO, MAX_RATIO))
    boxes_ref[...] = jnp.clip(g_ctr + half * g_sz, 0.0, limit) * sf


def _pack_bbox_head_params(w_cls, b_cls, w_reg, b_reg):
    """Fuse fc_cls/fc_reg into one (FUSED_ROWS, FEAT) weight with the delta
    means/stds folded in; reg rows are duplicated into a center-delta block
    and a size-delta block matching the output box-row layout."""
    stds = jnp.asarray(BBOX_STDS, jnp.float32)
    means = jnp.asarray(BBOX_MEANS, jnp.float32)

    r = jnp.arange(N_BOX_ROWS)
    c, k = r // 4, r % 4
    ctr_src = 4 * c + (k % 2)            # dx / dy column of w_reg per box row
    sz_src = 4 * c + 2 + (k % 2)         # dw / dh column of w_reg per box row
    ctr_std, ctr_mean = stds[k % 2], means[k % 2]
    sz_std, sz_mean = stds[2 + (k % 2)], means[2 + (k % 2)]

    w_ctr = (w_reg[:, ctr_src] * ctr_std[None, :]).T              # (16, FEAT)
    b_ctr = b_reg[0, ctr_src] * ctr_std + ctr_mean                # (16,)
    w_sz = (w_reg[:, sz_src] * sz_std[None, :]).T
    b_sz = b_reg[0, sz_src] * sz_std + sz_mean

    w_fused = jnp.zeros((FUSED_ROWS, FEAT), jnp.float32)
    w_fused = w_fused.at[CLS_ROW0:CLS_ROW0 + CLS_ROWS].set(w_cls.T)
    w_fused = w_fused.at[CTR_ROW0:CTR_ROW0 + N_BOX_ROWS].set(w_ctr)
    w_fused = w_fused.at[SZ_ROW0:SZ_ROW0 + N_BOX_ROWS].set(w_sz)

    b_fused = jnp.zeros((FUSED_ROWS, 1), jnp.float32)
    b_fused = b_fused.at[CLS_ROW0:CLS_ROW0 + CLS_ROWS, 0].set(b_cls[0])
    b_fused = b_fused.at[CTR_ROW0:CTR_ROW0 + N_BOX_ROWS, 0].set(b_ctr)
    b_fused = b_fused.at[SZ_ROW0:SZ_ROW0 + N_BOX_ROWS, 0].set(b_sz)
    return w_fused.astype(jnp.bfloat16), b_fused


def mask_rcnn_r_forward(feats, rois, img_hw, inv_scale, params,
                        target_class=None, imgs_per_step=None):
    """Returns (prediction_boxes, prediction_logits) like Mask_RCNN_R.forward."""
    B = feats.shape[0]
    L = B * N_PROPS
    w_fused, b_fused = _pack_bbox_head_params(*params)

    # Proposals (all images) on lanes, bf16 for the MXU operands (f32 acc).
    # TODO(synk): in the real model this transpose/cast belongs in the ROI
    # feature producer so it never materializes as a standalone HBM pass.
    featT = jnp.transpose(feats, (2, 0, 1)).reshape(FEAT, L).astype(jnp.bfloat16)

    # Per-proposal geometry tile: [px, py, pw, ph, img_w, img_h, sf_x, sf_y].
    px = (rois[..., 0] + rois[..., 2]) * 0.5
    py = (rois[..., 1] + rois[..., 3]) * 0.5
    pw = rois[..., 2] - rois[..., 0]
    ph = rois[..., 3] - rois[..., 1]
    img_w = jnp.broadcast_to(img_hw[:, 1:2], (B, N_PROPS))
    img_h = jnp.broadcast_to(img_hw[:, 0:1], (B, N_PROPS))
    sfx = jnp.broadcast_to(inv_scale[:, 0:1], (B, N_PROPS))
    sfy = jnp.broadcast_to(inv_scale[:, 1:2], (B, N_PROPS))
    geo = jnp.stack([px, py, pw, ph, img_w, img_h, sfx, sfy], axis=1)   # (B,8,N)
    geo = jnp.transpose(geo, (1, 0, 2)).reshape(GEO_ROWS, L).astype(jnp.float32)

    # Fat grid steps: keep exactly 2 steps for any even batch (amortizes the
    # fixed per-step overhead on v5e/v6e, keeps both v7x TensorCores busy).
    if imgs_per_step is None:
        imgs_per_step = B // 2 if (B >= 2 and B % 2 == 0) else 1
    assert B % imgs_per_step == 0
    lanes = imgs_per_step * N_PROPS
    num_steps = L // lanes

    grid_spec = pltpu.PrefetchScalarGridSpec(
        num_scalar_prefetch=0,
        grid=(num_steps,),
        in_specs=[
            pl.BlockSpec((FEAT, lanes), lambda s: (0, s)),
            pl.BlockSpec((GEO_ROWS, lanes), lambda s: (0, s)),
            pl.BlockSpec((FUSED_ROWS, FEAT), lambda s: (0, 0)),
            pl.BlockSpec((FUSED_ROWS, 1), lambda s: (0, 0)),
        ],
        out_specs=(
            pl.BlockSpec((N_BOX_ROWS, lanes), lambda s: (0, s)),
            pl.BlockSpec((CLS_ROWS_PAD, lanes), lambda s: (0, s)),
        ),
    )
    boxes_cm, logits_cm = pl.pallas_call(
        _mask_rcnn_r_kernel,
        out_shape=(jax.ShapeDtypeStruct((N_BOX_ROWS, L), jnp.float32),
                   jax.ShapeDtypeStruct((CLS_ROWS_PAD, L), jnp.float32)),
        grid_spec=grid_spec,
        compiler_params=pltpu.CompilerParams(
            dimension_semantics=("parallel",)),
    )(featT, geo, w_fused, b_fused)

    # Back to the PyTorch convention: (B, 1000, C, 4) and (B, 1000, C+1).
    # The F.pad-to-1000 zero fill is done here (XLA), not in the kernel.
    boxes = boxes_cm.reshape(NUM_CLASSES, 4, B, N_PROPS)
    boxes = jnp.transpose(boxes, (2, 3, 0, 1))                      # (B,N,C,4)
    boxes = jnp.pad(boxes, ((0, 0), (0, NUM_OUT - N_PROPS), (0, 0), (0, 0)))
    logits = logits_cm[:CLS_ROWS].reshape(CLS_ROWS, B, N_PROPS)
    logits = jnp.transpose(logits, (1, 2, 0))                       # (B,N,C+1)
    logits = jnp.pad(logits, ((0, 0), (0, NUM_OUT - N_PROPS), (0, 0)))

    # torch: torch.stack(...)[:, :, self.target_class, :]
    # target_class is None in __init__ -> inserts a singleton axis (same in jnp).
    prediction_boxes = boxes[:, :, target_class, :]
    prediction_logits = logits
    return prediction_boxes, prediction_logits


def _reference_forward(feats, rois, img_hw, inv_scale, params,
                       target_class=None):
    """Plain-JAX reference for the same math, used for a sanity check."""
    w_cls, b_cls, w_reg, b_reg = params
    cls_logits = jnp.einsum('bnf,fc->bnc', feats, w_cls) + b_cls[0]
    probs = jax.nn.softmax(cls_logits, axis=-1)
    reg = jnp.einsum('bnf,fc->bnc', feats, w_reg) + b_reg[0]
    B = feats.shape[0]
    reg = reg.reshape(B, N_PROPS, NUM_CLASSES, 4)
    d = reg * jnp.asarray(BBOX_STDS, jnp.float32) + jnp.asarray(BBOX_MEANS,
                                                                jnp.float32)
    dxy = d[..., 0:2]
    dwh = jnp.clip(d[..., 2:4], -MAX_RATIO, MAX_RATIO)
    pxy = ((rois[..., 0:2] + rois[..., 2:4]) * 0.5)[:, :, None, :]
    pwh = (rois[..., 2:4] - rois[..., 0:2])[:, :, None, :]
    gxy = pxy + pwh * dxy
    gwh = pwh * jnp.exp(dwh)
    x1y1 = gxy - gwh * 0.5
    x2y2 = gxy + gwh * 0.5
    wh = jnp.stack([img_hw[:, 1], img_hw[:, 0]], axis=-1)[:, None, None, :]
    sf = inv_scale[:, None, None, :]
    x1y1 = jnp.clip(x1y1, 0.0, wh) * sf
    x2y2 = jnp.clip(x2y2, 0.0, wh) * sf
    boxes = jnp.concatenate([x1y1, x2y2], axis=-1)
    boxes = jnp.pad(boxes, ((0, 0), (0, NUM_OUT - N_PROPS), (0, 0), (0, 0)))
    probs = jnp.pad(probs, ((0, 0), (0, NUM_OUT - N_PROPS), (0, 0)))
    return boxes[:, :, target_class, :], probs


if __name__ == "__main__":
    # TODO(synk): the ResNet/FPN backbone, RPN head, RoIAlign and the mmdet
    # test pipeline / data preprocessor have no clean standalone Pallas
    # equivalent; they are replaced by synthetic ROI features + proposals.
    B = 2
    H_IMG, W_IMG = 64.0, 80.0

    key = jax.random.PRNGKey(0)
    k1, k2, k3, k4, k5, k6, k7 = jax.random.split(key, 7)

    feats = jax.random.normal(k1, (B, N_PROPS, FEAT), jnp.float32)

    cx = jax.random.uniform(k2, (B, N_PROPS, 1), minval=0.0, maxval=W_IMG)
    cy = jax.random.uniform(k3, (B, N_PROPS, 1), minval=0.0, maxval=H_IMG)
    bw = jax.random.uniform(k4, (B, N_PROPS, 1), minval=4.0, maxval=32.0)
    bh = jax.random.uniform(k5, (B, N_PROPS, 1), minval=4.0, maxval=32.0)
    rois = jnp.concatenate([
        jnp.clip(cx - bw * 0.5, 0.0, W_IMG),
        jnp.clip(cy - bh * 0.5, 0.0, H_IMG),
        jnp.clip(cx + bw * 0.5, 0.0, W_IMG),
        jnp.clip(cy + bh * 0.5, 0.0, H_IMG),
    ], axis=-1).astype(jnp.float32)

    # Deterministic bbox-head parameters (fc_cls / fc_reg).
    w_cls = jax.random.normal(k6, (FEAT, NUM_CLASSES + 1), jnp.float32) * 0.05
    b_cls = jnp.zeros((1, NUM_CLASSES + 1), jnp.float32)
    w_reg = jax.random.normal(k7, (FEAT, 4 * NUM_CLASSES), jnp.float32) * 0.05
    b_reg = jnp.zeros((1, 4 * NUM_CLASSES), jnp.float32)
    params = (w_cls, b_cls, w_reg, b_reg)

    img_hw = jnp.array([[H_IMG, W_IMG]] * B, jnp.float32)        # (h, w) per img
    inv_scale = jnp.array([[1.25, 1.20]] * B, jnp.float32)       # 1/scale_factor

    boxes_out, logits_out = mask_rcnn_r_forward(
        feats, rois, img_hw, inv_scale, params, target_class=None)
    boxes_out = jax.block_until_ready(boxes_out)
    logits_out = jax.block_until_ready(logits_out)

    assert boxes_out.shape == (B, NUM_OUT, 1, NUM_CLASSES, 4)
    assert logits_out.shape == (B, NUM_OUT, NUM_CLASSES + 1)

    # Sanity check vs. plain-JAX f32 reference (loose tol: bf16 MXU inputs,
    # approx reciprocal in softmax).
    ref_boxes, ref_logits = _reference_forward(
        feats, rois, img_hw, inv_scale, params, target_class=None)
    np.testing.assert_allclose(np.asarray(logits_out), np.asarray(ref_logits),
                               rtol=5e-2, atol=1.5e-2)
    np.testing.assert_allclose(np.asarray(boxes_out), np.asarray(ref_boxes),
                               rtol=5e-2, atol=5e-1)

    print("KERNEL_OK")
</pallas_src>

<mosaic_0001>
module attributes {stable_mosaic.version = 11 : i64} {
  func.func @_mask_rcnn_r_kernel(%arg0: i32, %arg1: memref<128x256xbf16, #tpu.memory_space<vmem>>, %arg2: memref<8x256xf32, #tpu.memory_space<vmem>>, %arg3: memref<48x128xbf16, #tpu.memory_space<vmem>>, %arg4: memref<48x1xf32, #tpu.memory_space<vmem>>, %arg5: memref<16x256xf32, #tpu.memory_space<vmem>>, %arg6: memref<8x256xf32, #tpu.memory_space<vmem>>) attributes {dimension_semantics = [#tpu.dimension_semantics<parallel>], iteration_bounds = array<i64: 2>, scalar_prefetch = 0 : i64, scratch_operands = 0 : i64, tpu.core_type = #tpu.core_type<tc>, window_params = [{transform_indices = @transform_0, window_bounds = array<i64: 128, 256>}, {transform_indices = @transform_1, window_bounds = array<i64: 8, 256>}, {pipeline_mode = #tpu.pipeline_mode<synchronous>, transform_indices = @transform_2, window_bounds = array<i64: 48, 128>}, {pipeline_mode = #tpu.pipeline_mode<synchronous>, transform_indices = @transform_3, window_bounds = array<i64: 48, 1>}, {transform_indices = @transform_4, window_bounds = array<i64: 16, 256>}, {transform_indices = @transform_5, window_bounds = array<i64: 8, 256>}]} {
    %c0 = arith.constant 0 : index
    %c0_0 = arith.constant 0 : index
    %0 = vector.load %arg3[%c0, %c0_0] : memref<48x128xbf16, #tpu.memory_space<vmem>>, vector<48x128xbf16>
    %c0_1 = arith.constant 0 : index
    %c0_2 = arith.constant 0 : index
    %1 = vector.load %arg1[%c0_1, %c0_2] : memref<128x256xbf16, #tpu.memory_space<vmem>>, vector<128x256xbf16>
    %cst = arith.constant dense<0.000000e+00> : vector<48x256xf32>
    %2 = tpu.matmul %0, %1, %cst {dimension_numbers = #tpu.dot_dimension_numbers<[1], [0], [0], [1], [0, 0, 1, 1], [], []>} : vector<48x128xbf16>, vector<128x256xbf16>, vector<48x256xf32> -> vector<48x256xf32>
    %c0_3 = arith.constant 0 : index
    %c0_4 = arith.constant 0 : index
    %3 = vector.load %arg4[%c0_3, %c0_4] : memref<48x1xf32, #tpu.memory_space<vmem>>, vector<48x1xf32>
    %4 = vector.broadcast %3 : vector<48x1xf32> to vector<48x256xf32>
    %5 = arith.addf %2, %4 : vector<48x256xf32>
    %6 = tpu.iota {dimensions = array<i32: 0>} : vector<8x1xi32>
    %c5_i32 = arith.constant 5 : i32
    %7 = vector.broadcast %c5_i32 : i32 to vector<8x1xi32>
    %8 = arith.cmpi slt, %6, %7 : vector<8x1xi32>
    %9 = vector.extract_strided_slice %5 {offsets = [0, 0], sizes = [8, 256], strides = [1, 1]} : vector<48x256xf32> to vector<8x256xf32>
    %cst_5 = arith.constant -1.000000e+30 : f32
    %10 = vector.shape_cast %8 : vector<8x1xi1> to vector<8x1xi1>
    %11 = vector.broadcast %10 : vector<8x1xi1> to vector<8x256xi1>
    %12 = vector.broadcast %cst_5 : f32 to vector<8x256xf32>
    %13 = arith.select %11, %9, %12 : vector<8x256xi1>, vector<8x256xf32>
    %cst_6 = arith.constant dense<0xFF800000> : vector<256xf32>
    %14 = vector.multi_reduction <maximumf>, %13, %cst_6 [0] : vector<8x256xf32> to vector<256xf32>
    %15 = vector.shape_cast %14 : vector<256xf32> to vector<1x256xf32>
    %16 = vector.broadcast %15 : vector<1x256xf32> to vector<8x256xf32>
    %17 = arith.subf %13, %16 : vector<8x256xf32>
    %18 = math.exp %17 : vector<8x256xf32>
    %cst_7 = arith.constant dense<0.000000e+00> : vector<256xf32>
    %19 = vector.multi_reduction <add>, %18, %cst_7 [0] : vector<8x256xf32> to vector<256xf32>
    %20 = vector.shape_cast %19 : vector<256xf32> to vector<1x256xf32>
    %21 = tpu.reciprocal %20 {approx = true} : vector<1x256xf32> -> vector<1x256xf32>
    %22 = vector.broadcast %21 : vector<1x256xf32> to vector<8x256xf32>
    %23 = arith.mulf %18, %22 : vector<8x256xf32>
    %c0_8 = arith.constant 0 : index
    %c0_9 = arith.constant 0 : index
    %24 = vector.load %arg6[%c0_8, %c0_9] : memref<8x256xf32, #tpu.memory_space<vmem>>, vector<8x256xf32>
    tpu.vector_store %arg6[%c0_8, %c0_9], %23 {strides = array<i32>} : memref<8x256xf32, #tpu.memory_space<vmem>>, vector<8x256xf32>,
    %25 = vector.extract_strided_slice %5 {offsets = [8, 0], sizes = [16, 256], strides = [1, 1]} : vector<48x256xf32> to vector<16x256xf32>
    %26 = vector.extract_strided_slice %5 {offsets = [24, 0], sizes = [16, 256], strides = [1, 1]} : vector<48x256xf32> to vector<16x256xf32>
    %c0_10 = arith.constant 0 : index
    %c0_11 = arith.constant 0 : index
    %27 = vector.load %arg2[%c0_10, %c0_11] : memref<8x256xf32, #tpu.memory_space<vmem>>, vector<1x256xf32>
    %c1 = arith.constant 1 : index
    %c0_12 = arith.constant 0 : index
    %28 = vector.load %arg2[%c1, %c0_12] : memref<8x256xf32, #tpu.memory_space<vmem>>, vector<1x256xf32>
    %c2 = arith.constant 2 : index
    %c0_13 = arith.constant 0 : index
    %29 = vector.load %arg2[%c2, %c0_13] : memref<8x256xf32, #tpu.memory_space<vmem>>, vector<1x256xf32>
    %c3 = arith.constant 3 : index
    %c0_14 = arith.constant 0 : index
    %30 = vector.load %arg2[%c3, %c0_14] : memref<8x256xf32, #tpu.memory_space<vmem>>, vector<1x256xf32>
    %c4 = arith.constant 4 : index
    %c0_15 = arith.constant 0 : index
    %31 = vector.load %arg2[%c4, %c0_15] : memref<8x256xf32, #tpu.memory_space<vmem>>, vector<1x256xf32>
    %c5 = arith.constant 5 : index
    %c0_16 = arith.constant 0 : index
    %32 = vector.load %arg2[%c5, %c0_16] : memref<8x256xf32, #tpu.memory_space<vmem>>, vector<1x256xf32>
    %c6 = arith.constant 6 : index
    %c0_17 = arith.constant 0 : index
    %33 = vector.load %arg2[%c6, %c0_17] : memref<8x256xf32, #tpu.memory_space<vmem>>, vector<1x256xf32>
    %c7 = arith.constant 7 : index
    %c0_18 = arith.constant 0 : index
    %34 = vector.load %arg2[%c7, %c0_18] : memref<8x256xf32, #tpu.memory_space<vmem>>, vector<1x256xf32>
    %35 = tpu.iota {dimensions = array<i32: 0>} : vector<16x1xi32>
    %c2_i32 = arith.constant 2 : i32
    %c0_i32 = arith.constant 0 : i32
    %36 = arith.cmpi eq, %c2_i32, %c0_i32 : i32
    %c1_i32 = arith.constant 1 : i32
    %37 = arith.select %36, %c1_i32, %c2_i32 : i32
    %38 = vector.broadcast %37 : i32 to vector<16x1xi32>
    %39 = arith.remsi %35, %38 : vector<16x1xi32>
    %c0_i32_19 = arith.constant 0 : i32
    %40 = vector.broadcast %c0_i32_19 : i32 to vector<16x1xi32>
    %41 = arith.cmpi ne, %39, %40 : vector<16x1xi32>
    %c0_i32_20 = arith.constant 0 : i32
    %42 = vector.broadcast %c0_i32_20 : i32 to vector<16x1xi32>
    %43 = arith.cmpi slt, %39, %42 : vector<16x1xi32>
    %c0_i32_21 = arith.constant 0 : i32
    %44 = arith.cmpi slt, %37, %c0_i32_21 : i32
    %45 = vector.broadcast %44 : i1 to vector<16x1xi1>
    %46 = vector.broadcast %45 : vector<16x1xi1> to vector<16x1xi1>
    %47 = arith.xori %43, %46 : vector<16x1xi1>
    %48 = arith.andi %47, %41 : vector<16x1xi1>
    %49 = vector.broadcast %37 : i32 to vector<16x1xi32>
    %50 = arith.addi %39, %49 : vector<16x1xi32>
    %51 = arith.select %48, %50, %39 : vector<16x1xi1>, vector<16x1xi32>
    %c0_i32_22 = arith.constant 0 : i32
    %52 = vector.broadcast %c0_i32_22 : i32 to vector<16x1xi32>
    %53 = arith.cmpi eq, %51, %52 : vector<16x1xi32>
    %c4_i32 = arith.constant 4 : i32
    %c0_i32_23 = arith.constant 0 : i32
    %54 = arith.cmpi eq, %c4_i32, %c0_i32_23 : i32
    %c1_i32_24 = arith.constant 1 : i32
    %55 = arith.select %54, %c1_i32_24, %c4_i32 : i32
    %56 = vector.broadcast %55 : i32 to vector<16x1xi32>
    %57 = arith.remsi %35, %56 : vector<16x1xi32>
    %c0_i32_25 = arith.constant 0 : i32
    %58 = vector.broadcast %c0_i32_25 : i32 to vector<16x1xi32>
    %59 = arith.cmpi ne, %57, %58 : vector<16x1xi32>
    %c0_i32_26 = arith.constant 0 : i32
    %60 = vector.broadcast %c0_i32_26 : i32 to vector<16x1xi32>
    %61 = arith.cmpi slt, %57, %60 : vector<16x1xi32>
    %c0_i32_27 = arith.constant 0 : i32
    %62 = arith.cmpi slt, %55, %c0_i32_27 : i32
    %63 = vector.broadcast %62 : i1 to vector<16x1xi1>
    %64 = vector.broadcast %63 : vector<16x1xi1> to vector<16x1xi1>
    %65 = arith.xori %61, %64 : vector<16x1xi1>
    %66 = arith.andi %65, %59 : vector<16x1xi1>
    %67 = vector.broadcast %55 : i32 to vector<16x1xi32>
    %68 = arith.addi %57, %67 : vector<16x1xi32>
    %69 = arith.select %66, %68, %57 : vector<16x1xi1>, vector<16x1xi32>
    %c2_i32_28 = arith.constant 2 : i32
    %70 = vector.broadcast %c2_i32_28 : i32 to vector<16x1xi32>
    %71 = arith.cmpi slt, %69, %70 : vector<16x1xi32>
    %cst_29 = arith.constant -5.000000e-01 : f32
    %cst_30 = arith.constant 5.000000e-01 : f32
    %72 = vector.broadcast %cst_29 : f32 to vector<16x1xf32>
    %73 = vector.broadcast %cst_30 : f32 to vector<16x1xf32>
    %74 = arith.select %71, %72, %73 : vector<16x1xi1>, vector<16x1xf32>
    %75 = vector.shape_cast %53 : vector<16x1xi1> to vector<16x1xi1>
    %76 = vector.broadcast %75 : vector<16x1xi1> to vector<16x256xi1>
    %77 = vector.shape_cast %27 : vector<1x256xf32> to vector<1x256xf32>
    %78 = vector.broadcast %77 : vector<1x256xf32> to vector<16x256xf32>
    %79 = vector.shape_cast %28 : vector<1x256xf32> to vector<1x256xf32>
    %80 = vector.broadcast %79 : vector<1x256xf32> to vector<16x256xf32>
    %81 = arith.select %76, %78, %80 : vector<16x256xi1>, vector<16x256xf32>
    %82 = vector.shape_cast %53 : vector<16x1xi1> to vector<16x1xi1>
    %83 = vector.broadcast %82 : vector<16x1xi1> to vector<16x256xi1>
    %84 = vector.shape_cast %29 : vector<1x256xf32> to vector<1x256xf32>
    %85 = vector.broadcast %84 : vector<1x256xf32> to vector<16x256xf32>
    %86 = vector.shape_cast %30 : vector<1x256xf32> to vector<1x256xf32>
    %87 = vector.broadcast %86 : vector<1x256xf32> to vector<16x256xf32>
    %88 = arith.select %83, %85, %87 : vector<16x256xi1>, vector<16x256xf32>
    %89 = vector.shape_cast %53 : vector<16x1xi1> to vector<16x1xi1>
    %90 = vector.broadcast %89 : vector<16x1xi1> to vector<16x256xi1>
    %91 = vector.shape_cast %31 : vector<1x256xf32> to vector<1x256xf32>
    %92 = vector.broadcast %91 : vector<1x256xf32> to vector<16x256xf32>
    %93 = vector.shape_cast %32 : vector<1x256xf32> to vector<1x256xf32>
    %94 = vector.broadcast %93 : vector<1x256xf32> to vector<16x256xf32>
    %95 = arith.select %90, %92, %94 : vector<16x256xi1>, vector<16x256xf32>
    %96 = vector.shape_cast %53 : vector<16x1xi1> to vector<16x1xi1>
    %97 = vector.broadcast %96 : vector<16x1xi1> to vector<16x256xi1>
    %98 = vector.shape_cast %33 : vector<1x256xf32> to vector<1x256xf32>
    %99 = vector.broadcast %98 : vector<1x256xf32> to vector<16x256xf32>
    %100 = vector.shape_cast %34 : vector<1x256xf32> to vector<1x256xf32>
    %101 = vector.broadcast %100 : vector<1x256xf32> to vector<16x256xf32>
    %102 = arith.select %97, %99, %101 : vector<16x256xi1>, vector<16x256xf32>
    %103 = arith.mulf %88, %25 : vector<16x256xf32>
    %104 = arith.addf %81, %103 : vector<16x256xf32>
    %cst_31 = arith.constant -4.13516665 : f32
    %cst_32 = arith.constant 4.13516665 : f32
    %105 = vector.broadcast %cst_31 : f32 to vector<16x256xf32>
    %106 = arith.maximumf %105, %26 : vector<16x256xf32>
    %107 = vector.broadcast %cst_32 : f32 to vector<16x256xf32>
    %108 = arith.minimumf %107, %106 : vector<16x256xf32>
    %109 = math.exp %108 : vector<16x256xf32>
    %110 = arith.mulf %88, %109 : vector<16x256xf32>
    %111 = vector.broadcast %74 : vector<16x1xf32> to vector<16x256xf32>
    %112 = arith.mulf %111, %110 : vector<16x256xf32>
    %113 = arith.addf %104, %112 : vector<16x256xf32>
    %cst_33 = arith.constant 0.000000e+00 : f32
    %114 = vector.broadcast %cst_33 : f32 to vector<16x256xf32>
    %115 = arith.maximumf %114, %113 : vector<16x256xf32>
    %116 = arith.minimumf %95, %115 : vector<16x256xf32>
    %117 = arith.mulf %116, %102 : vector<16x256xf32>
    %c0_34 = arith.constant 0 : index
    %c0_35 = arith.constant 0 : index
    %118 = vector.load %arg5[%c0_34, %c0_35] : memref<16x256xf32, #tpu.memory_space<vmem>>, vector<16x256xf32>
    tpu.vector_store %arg5[%c0_34, %c0_35], %117 {strides = array<i32>} : memref<16x256xf32, #tpu.memory_space<vmem>>, vector<16x256xf32>,
    return
  }
  func.func @transform_0(%arg0: i32) -> (i32, i32) {
    %c0_i32 = arith.constant 0 : i32
    %c0_i32_0 = arith.constant 0 : i32
    return %c0_i32, %arg0 : i32, i32
  }
  func.func @transform_1(%arg0: i32) -> (i32, i32) {
    %c0_i32 = arith.constant 0 : i32
    %c0_i32_0 = arith.constant 0 : i32
    return %c0_i32, %arg0 : i32, i32
  }
  func.func @transform_2(%arg0: i32) -> (i32, i32) {
    %c0_i32 = arith.constant 0 : i32
    %c0_i32_0 = arith.constant 0 : i32
    %c0_i32_1 = arith.constant 0 : i32
    return %c0_i32, %c0_i32_0 : i32, i32
  }
  func.func @transform_3(%arg0: i32) -> (i32, i32) {
    %c0_i32 = arith.constant 0 : i32
    %c0_i32_0 = arith.constant 0 : i32
    %c0_i32_1 = arith.constant 0 : i32
    return %c0_i32, %c0_i32_0 : i32, i32
  }
  func.func @transform_4(%arg0: i32) -> (i32, i32) {
    %c0_i32 = arith.constant 0 : i32
    %c0_i32_0 = arith.constant 0 : i32
    return %c0_i32, %arg0 : i32, i32
  }
  func.func @transform_5(%arg0: i32) -> (i32, i32) {
    %c0_i32 = arith.constant 0 : i32
    %c0_i32_0 = arith.constant 0 : i32
    return %c0_i32, %arg0 : i32, i32
  }
}

</mosaic_0001>

<llo_original>
// kernel: tpu_custom_call.1
$region0: #{tpu_custom_call.1}
  #allocation0 [shape = 'u32[]', space=smem, size = 0x4, offset = 0x4, fixed_abs, tag = 'smem constant byte address 0x4 - core index']
  #allocation1 [shape = 'u32[72,128]{1,0:T(1,128)}', space=vmem, size = 0x9000, scoped, tag = 'internal scratch']
  %s0 = inlined_call_operand.hbm [shape: bf16[128,512], index: 0, kind: input, shape index: {}]
  %s1 = inlined_call_operand.vmem [shape: f32[8,512], index: 1, kind: input, shape index: {}]
  %s2 = inlined_call_operand.hbm [shape: bf16[48,128], index: 2, kind: input, shape index: {}]
  %s3 = inlined_call_operand.vmem [shape: f32[48,1], index: 3, kind: input, shape index: {}]
  %s4 = inlined_call_operand.hbm [shape: f32[16,512], index: 4, kind: output, shape index: {0}]
  %s5 = inlined_call_operand.hbm [shape: f32[8,512], index: 5, kind: output, shape index: {1}]
  %6 = xla_tuple %s4, %s5
  %s7 = sld [smem:[#allocation0]]
  $region65: #{tpu_custom_call.1} parent=0
    _
  %s9 = ssub.s32 1, %s7
  %s10 = scalar_select 0, %s9, %s7
  $region1: #{tpu_custom_call.1} parent=0
    #allocation2 [shape = 'u8[131072]{0}', space=vmem, size = 0x20000, scoped, tag = 'input window, operand 0']
    #allocation3 [shape = 's32[2]{0}', space=sflag, size = 0x8, scoped, tag = 'scoped memory for tpu_custom_call.1']
    #allocation4 [shape = 's32[2]{0}', space=sflag, size = 0x8, scoped, tag = 'scoped memory for tpu_custom_call.1']
    #allocation5 [shape = 'u8[12288]{0}', space=vmem, size = 0x3000, scoped, tag = 'input window, operand 2, single buffered']
    #allocation6 [shape = 's32[1]{0}', space=sflag, size = 0x4, scoped, tag = 'scoped memory for tpu_custom_call.1']
    #allocation7 [shape = 'u8[32768]{0}', space=vmem, size = 0x8000, scoped, tag = 'output window, operand 0']
    #allocation8 [shape = 'u8[16384]{0}', space=vmem, size = 0x4000, scoped, tag = 'output window, operand 1']
    #allocation9 [shape = 's32[2]{0}', space=sflag, size = 0x8, scoped, tag = 'scoped memory for tpu_custom_call.1']
    %11 = vsyncpa [#allocation3], 0
    %s12 = scalar_lea.sflag [#allocation3], 1
    %13 = vsyncpa %s12, 0
    %14 = vsyncpa [#allocation6], 0
    %15 = vsyncpa [#allocation4], 0
    %s16 = scalar_lea.sflag [#allocation4], 1
    %17 = vsyncpa %s16, 0
    %18 = vsyncpa [#allocation9], 0
    %s19 = scalar_lea.sflag [#allocation9], 1
    %20 = vsyncpa %s19, 0
    loop: start=0, step=1, limit=4
    $region2: #{tpu_custom_call.1} parent=1 // loop_pre_header
      _
    $region3: #{tpu_custom_call.1} parent=1 // loop_header
      %s22 = sphi 0, %s26
      %p23 = scmp.ge.s32.totalorder %s22, 4
      %s32 = sphi 0, %s34
      %s35 = sphi 0, %s32
      %s36 = sphi 0, %s35
      %s52 = sphi 0, %s36
      %s58 = sphi 0, %s60
      %s61 = sphi 0, %s58
      %s62 = sphi 0, %s61
      %s78 = sphi 0, %s62
      %s82 = sphi 0, %s82
      %s84 = sphi 0, %s82
      %s85 = sphi 0, %s84
      %s99 = sphi 0, %s85
      %s103 = sphi 0, %s103
      %s105 = sphi 0, %s103
      %s106 = sphi 0, %s105
      %s120 = sphi 0, %s106
      %s126 = sphi 0, %s128
      %s129 = sphi 0, %s126
      %s130 = sphi 0, %s129
      %s146 = sphi 0, %s130
      %s152 = sphi 0, %s154
      %s155 = sphi 0, %s152
      %s156 = sphi 0, %s155
      %s172 = sphi 0, %s156
    $region4: #{tpu_custom_call.1} parent=1 // loop_header_branch
      %25 = sbr.rel (%p23) target = $region8
    $region5: #{tpu_custom_call.1} parent=1 // loop_body
      %s27 = ssub.s32 %s22, 1
      %s28 = ssub.s32 %s22, 2
      %s29 = sadd.s32 %s22, 1
      %s30 = ssub.s32 %s22, %s29
      %p31 = scmp.eq.s32.totalorder %s30, 0
      %s33 = sadd.s32 %s32, 1
      %s34 = scalar_select %p31, %s32, %s33
      %p37 = pneg %p31
      %p38 = scmp.eq.s32.totalorder %s22, 1
      %p39 = por %p37, %p38
      %p40 = scmp.ne.s32.totalorder %s32, %s35
      %p41 = scmp.eq.s32.totalorder %s22, 0
      %p42 = por %p40, %p41
      %p43 = scmp.ne.s32.totalorder %s32, %s35
      %p44 = scmp.eq.s32.totalorder %s27, 1
      %p45 = por %p43, %p44
      %p46 = scmp.ne.s32.totalorder %s35, %s36
      %p47 = scmp.eq.s32.totalorder %s27, 0
      %p48 = por %p46, %p47
      %p49 = scmp.ne.s32.totalorder %s35, %s36
      %p50 = scmp.eq.s32.totalorder %s28, 1
      %p51 = por %p49, %p50
      %p53 = scmp.ne.s32.totalorder %s36, %s52
      %p54 = scmp.eq.s32.totalorder %s28, 0
      %p55 = por %p53, %p54
      %s56 = ssub.s32 %s22, %s29
      %p57 = scmp.eq.s32.totalorder %s56, 0
      %s59 = sadd.s32 %s58, 1
      %s60 = scalar_select %p57, %s58, %s59
      %p63 = pneg %p57
      %p64 = scmp.eq.s32.totalorder %s22, 1
      %p65 = por %p63, %p64
      %p66 = scmp.ne.s32.totalorder %s58, %s61
      %p67 = scmp.eq.s32.totalorder %s22, 0
      %p68 = por %p66, %p67
      %p69 = scmp.ne.s32.totalorder %s58, %s61
      %p70 = scmp.eq.s32.totalorder %s27, 1
      %p71 = por %p69, %p70
      %p72 = scmp.ne.s32.totalorder %s61, %s62
      %p73 = scmp.eq.s32.totalorder %s27, 0
      %p74 = por %p72, %p73
      %p75 = scmp.ne.s32.totalorder %s61, %s62
      %p76 = scmp.eq.s32.totalorder %s28, 1
      %p77 = por %p75, %p76
      %p79 = scmp.ne.s32.totalorder %s62, %s78
      %p80 = scmp.eq.s32.totalorder %s28, 0
      %p81 = por %p79, %p80
      %s83 = sadd.s32 %s82, 1
      %p86 = scmp.eq.s32.totalorder %s22, 1
      %p87 = scmp.ne.s32.totalorder %s82, %s84
      %p88 = scmp.eq.s32.totalorder %s22, 0
      %p89 = por %p87, %p88
      %p90 = scmp.ne.s32.totalorder %s82, %s84
      %p91 = scmp.eq.s32.totalorder %s27, 1
      %p92 = por %p90, %p91
      %p93 = scmp.ne.s32.totalorder %s84, %s85
      %p94 = scmp.eq.s32.totalorder %s27, 0
      %p95 = por %p93, %p94
      %p96 = scmp.ne.s32.totalorder %s84, %s85
      %p97 = scmp.eq.s32.totalorder %s28, 1
      %p98 = por %p96, %p97
      %p100 = scmp.ne.s32.totalorder %s85, %s99
      %p101 = scmp.eq.s32.totalorder %s28, 0
      %p102 = por %p100, %p101
      %s104 = sadd.s32 %s103, 1
      %p107 = scmp.eq.s32.totalorder %s22, 1
      %p108 = scmp.ne.s32.totalorder %s103, %s105
      %p109 = scmp.eq.s32.totalorder %s22, 0
      %p110 = por %p108, %p109
      %p111 = scmp.ne.s32.totalorder %s103, %s105
      %p112 = scmp.eq.s32.totalorder %s27, 1
      %p113 = por %p111, %p112
      %p114 = scmp.ne.s32.totalorder %s105, %s106
      %p115 = scmp.eq.s32.totalorder %s27, 0
      %p116 = por %p114, %p115
      %p117 = scmp.ne.s32.totalorder %s105, %s106
      %p118 = scmp.eq.s32.totalorder %s28, 1
      %p119 = por %p117, %p118
      %p121 = scmp.ne.s32.totalorder %s106, %s120
      %p122 = scmp.eq.s32.totalorder %s28, 0
      %p123 = por %p121, %p122
      %s124 = ssub.s32 %s22, %s29
      %p125 = scmp.eq.s32.totalorder %s124, 0
      %s127 = sadd.s32 %s126, 1
      %s128 = scalar_select %p125, %s126, %s127
      %p131 = pneg %p125
      %p132 = scmp.eq.s32.totalorder %s22, 1
      %p133 = por %p131, %p132
      %p134 = scmp.ne.s32.totalorder %s126, %s129
      %p135 = scmp.eq.s32.totalorder %s22, 0
      %p136 = por %p134, %p135
      %p137 = scmp.ne.s32.totalorder %s126, %s129
      %p138 = scmp.eq.s32.totalorder %s27, 1
      %p139 = por %p137, %p138
      %p140 = scmp.ne.s32.totalorder %s129, %s130
      %p141 = scmp.eq.s32.totalorder %s27, 0
      %p142 = por %p140, %p141
      %p143 = scmp.ne.s32.totalorder %s129, %s130
      %p144 = scmp.eq.s32.totalorder %s28, 1
      %p145 = por %p143, %p144
      %p147 = scmp.ne.s32.totalorder %s130, %s146
      %p148 = scmp.eq.s32.totalorder %s28, 0
      %p149 = por %p147, %p148
      %s150 = ssub.s32 %s22, %s29
      %p151 = scmp.eq.s32.totalorder %s150, 0
      %s153 = sadd.s32 %s152, 1
      %s154 = scalar_select %p151, %s152, %s153
      %p157 = pneg %p151
      %p158 = scmp.eq.s32.totalorder %s22, 1
      %p159 = por %p157, %p158
      %p160 = scmp.ne.s32.totalorder %s152, %s155
      %p161 = scmp.eq.s32.totalorder %s22, 0
      %p162 = por %p160, %p161
      %p163 = scmp.ne.s32.totalorder %s152, %s155
      %p164 = scmp.eq.s32.totalorder %s27, 1
      %p165 = por %p163, %p164
      %p166 = scmp.ne.s32.totalorder %s155, %s156
      %p167 = scmp.eq.s32.totalorder %s27, 0
      %p168 = por %p166, %p167
      %p169 = scmp.ne.s32.totalorder %s155, %s156
      %p170 = scmp.eq.s32.totalorder %s28, 1
      %p171 = por %p169, %p170
      %p173 = scmp.ne.s32.totalorder %s156, %s172
      %p174 = scmp.eq.s32.totalorder %s28, 0
      %p175 = por %p173, %p174
      %p176 = scmp.le.s32.totalorder 1, %s22
      %p177 = scmp.lt.s32.totalorder %s22, 3
      %p178 = pnand %p176, %p177
      %p179 = pneg %p178
      // Predicated region
      $region9: #{tpu_custom_call.1} parent=5 // pred_check
        _
      $region10: #{tpu_custom_call.1} parent=5 // pred_check_branch
        %181 = sbr.rel (%p178) target = $region12
      $region11: #{tpu_custom_call.1} parent=5 // pred_region
        %s182 = ssub.s32 %s22, 1
        // Predicated region
        $region13: #{tpu_custom_call.1} parent=11 // pred_check
          %p183 = pneg %p95
        $region14: #{tpu_custom_call.1} parent=11 // pred_check_branch
          %185 = sbr.rel (%p183) target = $region16
        $region15: #{tpu_custom_call.1} parent=11 // pred_region
          %187 = vsyncadd [#allocation6], 0
          %s188 = sshll.u32 %s2, 4
          %s189 = int_to_ptr.hbm [resolvable:$true] %s188
          %s190 = sshll.u32 [#allocation5], 4
          %s191 = int_to_ptr.vmem [resolvable:$true] %s190
          %196 = dma.hbm_to_vmem [thread:$0]  %s189, 384, %s191, [#allocation6], 64, 64, 4
        $region16: #{tpu_custom_call.1} parent=11 // pred_fallthru
          _
        // Predicated region
        $region17: #{tpu_custom_call.1} parent=11 // pred_check
          %p197 = pneg %p116
        $region18: #{tpu_custom_call.1} parent=11 // pred_check_branch
          %199 = sbr.rel (%p197) target = $region20
        $region19: #{tpu_custom_call.1} parent=11 // pred_region
          _
        $region20: #{tpu_custom_call.1} parent=11 // pred_fallthru
          _
      $region12: #{tpu_custom_call.1} parent=5 // pred_fallthru
        _
      %p200 = scmp.lt.s32.totalorder %s22, 2
      // Predicated region
      $region21: #{tpu_custom_call.1} parent=5 // pred_check
        %p201 = pneg %p200
      $region22: #{tpu_custom_call.1} parent=5 // pred_check_branch
        %203 = sbr.rel (%p201) target = $region24
      $region23: #{tpu_custom_call.1} parent=5 // pred_region
        // Predicated region
        $region25: #{tpu_custom_call.1} parent=23 // pred_check
          %p204 = pneg %p42
        $region26: #{tpu_custom_call.1} parent=23 // pred_check_branch
          %206 = sbr.rel (%p204) target = $region28
        $region27: #{tpu_custom_call.1} parent=23 // pred_region
          %s207 = sand.u32 %s32, 1
          %s208 = scalar_lea.sflag [#allocation3], %s207
          %s209 = sand.u32 %s32, 1
          %s210 = smul.addr %s209, 128
          %s211 = scalar_lea.vmem [#allocation2], %s210
          %s212 = smul.u32 2, %s22
          %214 = vsyncadd %s208, 0
          %s215 = smul.addr %s212, 4
          %s216 = scalar_lea.hbm %s0, %s215
          %s217 = sshll.u32 %s216, 4
          %s218 = int_to_ptr.hbm [resolvable:$true] %s217
          %s219 = sshll.u32 %s211, 4
          %s220 = int_to_ptr.vmem [resolvable:$true] %s219
          %225 = dma.hbm_to_vmem [thread:$0]  %s218, 2048, %s220, %s208, 256, 128, 8
        $region28: #{tpu_custom_call.1} parent=23 // pred_fallthru
          _
        // Predicated region
        $region29: #{tpu_custom_call.1} parent=23 // pred_check
          %p226 = pneg %p68
        $region30: #{tpu_custom_call.1} parent=23 // pred_check_branch
          %228 = sbr.rel (%p226) target = $region32
        $region31: #{tpu_custom_call.1} parent=23 // pred_region
          %s229 = smul.u32 2, %s22
          %p230 = scmp.lt.s32.totalorder %s229, 3
          %s231 = scalar_select %p230, %s229, 3
          %s232 = smul.addr %s231, 8
          %s233 = scalar_lea.vmem %s1, %s232
          %s234 = smul.u32 2, %s22
        $region32: #{tpu_custom_call.1} parent=23 // pred_fallthru
          _
      $region24: #{tpu_custom_call.1} parent=5 // pred_fallthru
        _
      %p235 = scmp.le.s32.totalorder 1, %s22
      %p236 = scmp.lt.s32.totalorder %s22, 3
      %p237 = pnand %p235, %p236
      %p238 = pneg %p237
      // Predicated region
      $region33: #{tpu_custom_call.1} parent=5 // pred_check
        _
      $region34: #{tpu_custom_call.1} parent=5 // pred_check_branch
        %240 = sbr.rel (%p237) target = $region36
      $region35: #{tpu_custom_call.1} parent=5 // pred_region
        %s241 = ssub.s32 %s22, 1
        %s242 = sand.u32 %s35, 1
        %s243 = scalar_lea.sflag [#allocation3], %s242
        %s244 = sand.u32 %s35, 1
        %s245 = smul.addr %s244, 128
        %s246 = scalar_lea.vmem [#allocation2], %s245
        // Predicated region
        $region37: #{tpu_custom_call.1} parent=35 // pred_check
          %p247 = pneg %p48
        $region38: #{tpu_custom_call.1} parent=35 // pred_check_branch
          %249 = sbr.rel (%p247) target = $region40
        $region39: #{tpu_custom_call.1} parent=35 // pred_region
          %251 = dma.done %s243, 2048
        $region40: #{tpu_custom_call.1} parent=35 // pred_fallthru
          _
        // Predicated region
        $region41: #{tpu_custom_call.1} parent=35 // pred_check
          %p252 = pneg %p95
        $region42: #{tpu_custom_call.1} parent=35 // pred_check_branch
          %254 = sbr.rel (%p252) target = $region44
        $region43: #{tpu_custom_call.1} parent=35 // pred_region
          %256 = dma.done [#allocation6], 384
        $region44: #{tpu_custom_call.1} parent=35 // pred_fallthru
          _
        %s257 = sand.u32 %s35, 1
        %s258 = scalar_lea.sflag [#allocation3], %s257
        %s259 = sand.u32 %s35, 1
        %s260 = smul.addr %s259, 128
        %s261 = scalar_lea.vmem [#allocation2], %s260
        %p262 = pneg %p48
        %p263 = pneg %p45
        %s264 = smul.u32 2, %s27
        %p265 = scmp.lt.s32.totalorder %s264, 3
        %s266 = scalar_select %p265, %s264, 3
        %s267 = smul.addr %s266, 8
        %s268 = scalar_lea.vmem %s1, %s267
        %p269 = pneg %p74
        %p270 = pneg %p71
        %p271 = pneg %p95
        %p272 = pneg %p92
        %p273 = pneg %p116
        %p274 = pneg %p113
        %p275 = pneg %p142
        %p276 = pneg %p139
        %s277 = sand.u32 %s129, 1
        %s278 = scalar_lea.sflag [#allocation4], %s277
        %s279 = sand.u32 %s129, 1
        %s280 = smul.addr %s279, 32
        %s281 = scalar_lea.vmem [#allocation7], %s280
        %p282 = pneg %p168
        %p283 = pneg %p165
        %s284 = sand.u32 %s155, 1
        %s285 = scalar_lea.sflag [#allocation9], %s284
        %s286 = sand.u32 %s155, 1
        %s287 = smul.addr %s286, 16
        %s288 = scalar_lea.vmem [#allocation8], %s287
        %s289 = smul.u32 2, %s27
        %s290 = smul.u32 2, %s27
        %p291 = scmp.lt.s32.totalorder %s290, 3
        %s292 = scalar_select %p291, %s290, 3
        %s293 = smul.addr %s292, 8
        %s294 = scalar_lea.vmem %s1, %s293
        %s295 = smul.u32 2, %s27
        %s296 = smul.u32 2, %s27
        %s297 = smul.u32 2, %s27
        %v298 = vld [vmem:[#allocation5] sm:$0xf]
        %v299 = vld [vmem:[#allocation5 + $0x4] sm:$0xf]
        %v300 = vld [vmem:[#allocation5 + $0x8] sm:$0xf]
        %v301 = vld [vmem:[#allocation5 + $0xc] sm:$0xf]
        %v302 = vld [vmem:[#allocation5 + $0x10] sm:$0xf]
        %v303 = vld [vmem:[#allocation5 + $0x14] sm:$0xf]
        %v304 = vld [vmem:[%s246] sm:$0xff]
        %v305 = vld [vmem:[%s246 + $0x8] sm:$0xff]
        %v306 = vld [vmem:[%s246 + $0x10] sm:$0xff]
        %v307 = vld [vmem:[%s246 + $0x18] sm:$0xff]
        %v308 = vld [vmem:[%s246 + $0x20] sm:$0xff]
        %v309 = vld [vmem:[%s246 + $0x28] sm:$0xff]
        %v310 = vld [vmem:[%s246 + $0x30] sm:$0xff]
        %v311 = vld [vmem:[%s246 + $0x38] sm:$0xff]
        %v312 = vld [vmem:[%s246 + $0x40] sm:$0xff]
        %v313 = vld [vmem:[%s246 + $0x48] sm:$0xff]
        %v314 = vld [vmem:[%s246 + $0x50] sm:$0xff]
        %v315 = vld [vmem:[%s246 + $0x58] sm:$0xff]
        %v316 = vld [vmem:[%s246 + $0x60] sm:$0xff]
        %v317 = vld [vmem:[%s246 + $0x68] sm:$0xff]
        %v318 = vld [vmem:[%s246 + $0x70] sm:$0xff]
        %v319 = vld [vmem:[%s246 + $0x78] sm:$0xff]
        %v320 = vld [vmem:[%s3] sm:$0xff]
        %v321 = vld [vmem:[%s3 + $0x8] sm:$0xff]
        %v322 = vld [vmem:[%s3 + $0x10] sm:$0xff]
        %v323 = vld [vmem:[%s3 + $0x18] sm:$0xff]
        %v324 = vld [vmem:[%s3 + $0x20] sm:$0xff]
        %v325 = vld [vmem:[%s3 + $0x28] sm:$0xff]
        %327 = vset.pattern.permute.xlu0 0
        %328 = vperm.xlu0 %327, %v320
        %v329 = vpop.permute.xlu0 %328
        %332 = vset.pattern.permute.xlu0 0
        %333 = vperm.xlu0 %332, %v321
        %v334 = vpop.permute.xlu0 %333
        %337 = vset.pattern.permute.xlu0 0
        %338 = vperm.xlu0 %337, %v322
        %v339 = vpop.permute.xlu0 %338
        %342 = vset.pattern.permute.xlu0 0
        %343 = vperm.xlu0 %342, %v323
        %v344 = vpop.permute.xlu0 %343
        %347 = vset.pattern.permute.xlu0 0
        %348 = vperm.xlu0 %347, %v324
        %v349 = vpop.permute.xlu0 %348
        %352 = vset.pattern.permute.xlu0 0
        %353 = vperm.xlu0 %352, %v325
        %v354 = vpop.permute.xlu0 %353
        %v361 = vunpack.c.l.b16 %v298
        %v362 = vunpack.c.l.b16 %v299
        %v363 = vunpack.c.l.b16 %v300
        %v364 = vunpack.c.l.b16 %v301
        %v365 = vunpack.c.l.b16 %v302
        %v366 = vunpack.c.l.b16 %v303
        %v367 = vpack.c.b16 %v362, %v361
        %v368 = vpack.c.b16 %v364, %v363
        %v369 = vpack.c.b16 %v366, %v365
        %v389 = vunpack.c.l.b16 %v304
        %v390 = vunpack.c.h.b16 %v304
        %v391 = vunpack.c.l.b16 %v305
        %v392 = vunpack.c.h.b16 %v305
        %v393 = vunpack.c.l.b16 %v306
        %v394 = vunpack.c.h.b16 %v306
        %v395 = vunpack.c.l.b16 %v307
        %v396 = vunpack.c.h.b16 %v307
        %v397 = vunpack.c.l.b16 %v308
        %v398 = vunpack.c.h.b16 %v308
        %v399 = vunpack.c.l.b16 %v309
        %v400 = vunpack.c.h.b16 %v309
        %v401 = vunpack.c.l.b16 %v310
        %v402 = vunpack.c.h.b16 %v310
        %v403 = vunpack.c.l.b16 %v311
        %v404 = vunpack.c.h.b16 %v311
        %v405 = vunpack.c.l.b16 %v312
        %v406 = vunpack.c.h.b16 %v312
        %v407 = vunpack.c.l.b16 %v313
        %v408 = vunpack.c.h.b16 %v313
        %v409 = vunpack.c.l.b16 %v314
        %v410 = vunpack.c.h.b16 %v314
        %v411 = vunpack.c.l.b16 %v315
        %v412 = vunpack.c.h.b16 %v315
        %v413 = vunpack.c.l.b16 %v316
        %v414 = vunpack.c.h.b16 %v316
        %v415 = vunpack.c.l.b16 %v317
        %v416 = vunpack.c.h.b16 %v317
        %v417 = vunpack.c.l.b16 %v318
        %v418 = vunpack.c.h.b16 %v318
        %v419 = vunpack.c.l.b16 %v319
        %v420 = vunpack.c.h.b16 %v319
        %v421 = vpack.c.b16 %v391, %v389
        %v422 = vpack.c.b16 %v392, %v390
        %v423 = vpack.c.b16 %v395, %v393
        %v424 = vpack.c.b16 %v396, %v394
        %v425 = vpack.c.b16 %v399, %v397
        %v426 = vpack.c.b16 %v400, %v398
        %v427 = vpack.c.b16 %v403, %v401
        %v428 = vpack.c.b16 %v404, %v402
        %v429 = vpack.c.b16 %v407, %v405
        %v430 = vpack.c.b16 %v408, %v406
        %v431 = vpack.c.b16 %v411, %v409
        %v432 = vpack.c.b16 %v412, %v410
        %v433 = vpack.c.b16 %v415, %v413
        %v434 = vpack.c.b16 %v416, %v414
        %v435 = vpack.c.b16 %v419, %v417
        %v436 = vpack.c.b16 %v420, %v418
        %453 = vmatpush.bf16.msra.mxu0 %v435
        %454 = vmatpush.bf16.msra.mxu0 %v433
        %455 = vmatpush.bf16.msra.mxu0 %v431
        %456 = vmatpush.bf16.msra.mxu0 %v429
        %457 = vmatpush.bf16.msra.mxu0 %v427
        %458 = vmatpush.bf16.msra.mxu0 %v425
        %459 = vmatpush.bf16.msra.mxu0 %v423
        %460 = vmatpush.bf16.msra.mxu0 %v421
        %461 = vmatmul.bf16.gmra.mxu0 %v367
        %v462 = vpop.f32.mrf.mxu0
        %v463 = vadd.f32 %v329, %v462
        %v464 = vpop.f32.mrf.mxu0
        %v465 = vadd.f32 %v334, %v464
        %466 = vmatmul.bf16.gmra.mxu0 %v368
        %v467 = vpop.f32.mrf.mxu0
        %v468 = vadd.f32 %v339, %v467
        %v469 = vpop.f32.mrf.mxu0
        %v470 = vadd.f32 %v344, %v469
        %471 = vmatmul.bf16.gmra.mxu0 %v369
        %v472 = vpop.f32.mrf.mxu0
        %v473 = vadd.f32 %v349, %v472
        %v474 = vpop.f32.mrf.mxu0
        %475 = vdwg.mxu0
        %476 = vmatpush.bf16.msra.mxu0 %v436
        %477 = vmatpush.bf16.msra.mxu0 %v434
        %478 = vmatpush.bf16.msra.mxu0 %v432
        %479 = vmatpush.bf16.msra.mxu0 %v430
        %480 = vmatpush.bf16.msra.mxu0 %v428
        %481 = vmatpush.bf16.msra.mxu0 %v426
        %482 = vmatpush.bf16.msra.mxu0 %v424
        %483 = vmatpush.bf16.msra.mxu0 %v422
        %484 = vmatmul.bf16.gmra.mxu0 %v367
        %v485 = vpop.f32.mrf.mxu0
        %v486 = vadd.f32 %v329, %v485
        %v487 = vpop.f32.mrf.mxu0
        %v488 = vadd.f32 %v334, %v487
        %489 = vmatmul.bf16.gmra.mxu0 %v368
        %v490 = vpop.f32.mrf.mxu0
        %v491 = vadd.f32 %v339, %v490
        %v492 = vpop.f32.mrf.mxu0
        %v493 = vadd.f32 %v344, %v492
        %494 = vmatmul.bf16.gmra.mxu0 %v369
        %v495 = vpop.f32.mrf.mxu0
        %v496 = vadd.f32 %v349, %v495
        %v497 = vpop.f32.mrf.mxu0
        %498 = vdwg.mxu0
        %v499 = vlaneseq
        %v500 = vshrl.u32 %v499, 7
        %vm501 = vcmp.lt.s32.totalorder %v500, 5
        %v502 = vsel %vm501, 1, 0
        %vm503 = vcmp.eq.s32.totalorder %v502, 1
        %v504 = vsel %vm503, %v463, -1e+30
        %v505 = vsel %vm503, %v486, -1e+30
        %v506 = vrot.slane %v504, 4
        %v507 = vmax.f32 %v504, %v506
        %v508 = vrot.slane %v507, 2
        %v509 = vmax.f32 %v507, %v508
        %v510 = vrot.slane %v509, 1
        %v511 = vmax.f32 %v509, %v510
        %v512 = vrot.slane %v505, 4
        %v513 = vmax.f32 %v505, %v512
        %v514 = vrot.slane %v513, 2
        %v515 = vmax.f32 %v513, %v514
        %v516 = vrot.slane %v515, 1
        %v517 = vmax.f32 %v515, %v516
        %v518 = vsub.f32 %v504, %v511
        %v519 = vsub.f32 %v505, %v517
        %v520 = vmul.f32 %v518, 1.442695
        %v521 = vpow.pop %v520
        %v522 = vmul.f32 %v519, 1.442695
        %v523 = vpow.pop %v522
        %v524 = vrot.slane %v521, 4
        %v525 = vadd.f32 %v521, %v524
        %v526 = vrot.slane %v525, 2
        %v527 = vadd.f32 %v525, %v526
        %v528 = vrot.slane %v527, 1
        %v529 = vadd.f32 %v527, %v528
        %v530 = vrot.slane %v523, 4
        %v531 = vadd.f32 %v523, %v530
        %v532 = vrot.slane %v531, 2
        %v533 = vadd.f32 %v531, %v532
        %v534 = vrot.slane %v533, 1
        %v535 = vadd.f32 %v533, %v534
        %v536 = vrcp.pop %v529
        %v537 = vrcp.pop %v535
        %v538 = vmul.f32 %v521, %v536
        %v539 = vmul.f32 %v523, %v537
        %540 = vst [vmem:[%s288] sm:$0xff] %v538
        %541 = vst [vmem:[%s288 + $0x8] sm:$0xff] %v539
        %v542 = vld [vmem:[%s294] ss:$8 sm:$0x3]
        %s543 = scalar_lea.vmem %s294, 1
        %v544 = vld [vmem:[%s543] ss:$8 sm:$0x3]
        %s545 = scalar_lea.vmem %s294, 2
        %v546 = vld [vmem:[%s545] ss:$8 sm:$0x3]
        %s547 = scalar_lea.vmem %s294, 3
        %v548 = vld [vmem:[%s547] ss:$8 sm:$0x3]
        %s549 = scalar_lea.vmem %s294, 4
        %v550 = vld [vmem:[%s549] ss:$8 sm:$0x3]
        %s551 = scalar_lea.vmem %s294, 5
        %v552 = vld [vmem:[%s551] ss:$8 sm:$0x3]
        %s553 = scalar_lea.vmem %s294, 6
        %v554 = vld [vmem:[%s553] ss:$8 sm:$0x3]
        %s555 = scalar_lea.vmem %s294, 7
        %v556 = vld [vmem:[%s555] ss:$8 sm:$0x3]
        %v557 = vadd.s32 %v500, 8
        %vm558 = vcmp.lt.s32.totalorder %v500, 0
        %v559 = vsub.s32 0, %v500
        %v560 = vsel %vm558, %v559, %v500
        %v561 = vshrl.u32 %v560, 1
        %v562 = vand.u32 %v560, 1
        %v563 = vsub.s32 0, %v562
        %v564 = vsel %vm558, %v563, %v562
        %vm565 = vcmp.lt.s32.totalorder %v557, 0
        %v566 = vsub.s32 0, %v557
        %v567 = vsel %vm565, %v566, %v557
        %v568 = vshrl.u32 %v567, 1
        %v569 = vand.u32 %v567, 1
        %v570 = vsub.s32 0, %v569
        %v571 = vsel %vm565, %v570, %v569
        %vm572 = vcmp.ne.s32.totalorder %v564, 0
        %vm573 = vcmp.ne.s32.totalorder %v571, 0
        %vm574 = vcmp.lt.s32.totalorder %v564, 0
        %vm575 = vcmp.lt.s32.totalorder %v571, 0
        %vm576 = vmand %vm574, %vm572
        %vm577 = vmand %vm575, %vm573
        %v578 = vadd.s32 %v564, 2
        %v579 = vadd.s32 %v571, 2
        %v580 = vsel %vm576, %v578, %v564
        %v581 = vsel %vm577, %v579, %v571
        %vm582 = vcmp.eq.s32.totalorder %v580, 0
        %vm583 = vcmp.eq.s32.totalorder %v581, 0
        %vm584 = vcmp.lt.s32.totalorder %v500, 0
        %v585 = vsub.s32 0, %v500
        %v586 = vsel %vm584, %v585, %v500
        %v587 = vshrl.u32 %v586, 2
        %v588 = vand.u32 %v586, 3
        %v589 = vsub.s32 0, %v588
        %v590 = vsel %vm584, %v589, %v588
        %vm591 = vcmp.lt.s32.totalorder %v557, 0
        %v592 = vsub.s32 0, %v557
        %v593 = vsel %vm591, %v592, %v557
        %v594 = vshrl.u32 %v593, 2
        %v595 = vand.u32 %v593, 3
        %v596 = vsub.s32 0, %v595
        %v597 = vsel %vm591, %v596, %v595
        %vm598 = vcmp.ne.s32.totalorder %v590, 0
        %vm599 = vcmp.ne.s32.totalorder %v597, 0
        %vm600 = vcmp.lt.s32.totalorder %v590, 0
        %vm601 = vcmp.lt.s32.totalorder %v597, 0
        %vm602 = vmand %vm600, %vm598
        %vm603 = vmand %vm601, %vm599
        %v604 = vadd.s32 %v590, 4
        %v605 = vadd.s32 %v597, 4
        %v606 = vsel %vm602, %v604, %v590
        %v607 = vsel %vm603, %v605, %v597
        %vm608 = vcmp.lt.s32.totalorder %v606, 2
        %vm609 = vcmp.lt.s32.totalorder %v607, 2
        %v610 = vsel %vm608, -0.5, 0.5
        %v611 = vsel %vm609, -0.5, 0.5
        %v612 = vsel %vm582, 1, 0
        %v613 = vsel %vm583, 1, 0
        %vm614 = vcmp.eq.s32.totalorder %v612, 1
        %vm615 = vcmp.eq.s32.totalorder %v613, 1
        %v617 = vperm.slane %v542, 0
        %v618 = vperm.slane %v542, 1
        %v622 = vperm.slane %v544, 0
        %v623 = vperm.slane %v544, 1
        %v626 = vsel %vm614, %v617, %v622
        %v627 = vsel %vm614, %v618, %v623
        %v628 = vsel %vm615, %v617, %v622
        %v629 = vsel %vm615, %v618, %v623
        %v631 = vperm.slane %v546, 0
        %v632 = vperm.slane %v546, 1
        %v636 = vperm.slane %v548, 0
        %v637 = vperm.slane %v548, 1
        %v640 = vsel %vm614, %v631, %v636
        %v641 = vsel %vm614, %v632, %v637
        %v642 = vsel %vm615, %v631, %v636
        %v643 = vsel %vm615, %v632, %v637
        %v645 = vperm.slane %v550, 0
        %v646 = vperm.slane %v550, 1
        %v650 = vperm.slane %v552, 0
        %v651 = vperm.slane %v552, 1
        %v654 = vsel %vm614, %v645, %v650
        %v655 = vsel %vm614, %v646, %v651
        %v656 = vsel %vm615, %v645, %v650
        %v657 = vsel %vm615, %v646, %v651
        %v659 = vperm.slane %v554, 0
        %v660 = vperm.slane %v554, 1
        %v664 = vperm.slane %v556, 0
        %v665 = vperm.slane %v556, 1
        %v668 = vsel %vm614, %v659, %v664
        %v669 = vsel %vm614, %v660, %v665
        %v670 = vsel %vm615, %v659, %v664
        %v671 = vsel %vm615, %v660, %v665
        %v672 = vmul.f32 %v640, %v465
        %v673 = vmul.f32 %v641, %v488
        %v674 = vmul.f32 %v642, %v468
        %v675 = vmul.f32 %v643, %v491
        %v676 = vadd.f32 %v626, %v672
        %v677 = vadd.f32 %v627, %v673
        %v678 = vadd.f32 %v628, %v674
        %v679 = vadd.f32 %v629, %v675
        %v680 = vmax.f32 %v470, -4.1351666
        %v681 = vmax.f32 %v493, -4.1351666
        %v682 = vmax.f32 %v473, -4.1351666
        %v683 = vmax.f32 %v496, -4.1351666
        %v684 = vmin.f32 %v680, 4.1351666
        %v685 = vmin.f32 %v681, 4.1351666
        %v686 = vmin.f32 %v682, 4.1351666
        %v687 = vmin.f32 %v683, 4.1351666
        %v688 = vmul.f32 %v684, 1.442695
        %v689 = vpow.pop %v688
        %v690 = vmul.f32 %v685, 1.442695
        %v691 = vpow.pop %v690
        %v692 = vmul.f32 %v686, 1.442695
        %v693 = vpow.pop %v692
        %v694 = vmul.f32 %v687, 1.442695
        %v695 = vpow.pop %v694
        %v696 = vmul.f32 %v640, %v689
        %v697 = vmul.f32 %v641, %v691
        %v698 = vmul.f32 %v642, %v693
        %v699 = vmul.f32 %v643, %v695
        %v700 = vmul.f32 %v610, %v696
        %v701 = vmul.f32 %v610, %v697
        %v702 = vmul.f32 %v611, %v698
        %v703 = vmul.f32 %v611, %v699
        %v704 = vadd.f32 %v676, %v700
        %v705 = vadd.f32 %v677, %v701
        %v706 = vadd.f32 %v678, %v702
        %v707 = vadd.f32 %v679, %v703
        %v708 = vmax.f32 %v704, 0.0
        %v709 = vmax.f32 %v705, 0.0
        %v710 = vmax.f32 %v706, 0.0
        %v711 = vmax.f32 %v707, 0.0
        %v712 = vmin.f32 %v654, %v708
        %v713 = vmin.f32 %v655, %v709
        %v714 = vmin.f32 %v656, %v710
        %v715 = vmin.f32 %v657, %v711
        %v716 = vmul.f32 %v712, %v668
        %v717 = vmul.f32 %v713, %v669
        %v718 = vmul.f32 %v714, %v670
        %v719 = vmul.f32 %v715, %v671
        %720 = vst [vmem:[%s281] sm:$0xff] %v716
        %721 = vst [vmem:[%s281 + $0x8] sm:$0xff] %v717
        %722 = vst [vmem:[%s281 + $0x10] sm:$0xff] %v718
        %723 = vst [vmem:[%s281 + $0x18] sm:$0xff] %v719
        %s724 = sand.u32 %s129, 1
        %s725 = scalar_lea.sflag [#allocation4], %s724
        %s726 = sand.u32 %s129, 1
        %s727 = smul.addr %s726, 32
        %s728 = scalar_lea.vmem [#allocation7], %s727
        %s729 = sand.u32 %s155, 1
        %s730 = scalar_lea.sflag [#allocation9], %s729
        %s731 = sand.u32 %s155, 1
        %s732 = smul.addr %s731, 16
        %s733 = scalar_lea.vmem [#allocation8], %s732
        // Predicated region
        $region45: #{tpu_custom_call.1} parent=35 // pred_check
          %p734 = pneg %p139
        $region46: #{tpu_custom_call.1} parent=35 // pred_check_branch
          %736 = sbr.rel (%p734) target = $region48
        $region47: #{tpu_custom_call.1} parent=35 // pred_region
          %s737 = smul.u32 2, %s27
          %739 = vsyncadd %s725, 0
          %s740 = smul.addr %s737, 8
          %s741 = scalar_lea.hbm %s4, %s740
          %s742 = sshll.u32 %s728, 4
          %s743 = int_to_ptr.vmem [resolvable:$true] %s742
          %s744 = sshll.u32 %s741, 4
          %s745 = int_to_ptr.hbm [resolvable:$true] %s744
          %750 = dma.vmem_to_hbm [thread:$0]  %s743, 512, %s745, %s725, 256, 512, 16
        $region48: #{tpu_custom_call.1} parent=35 // pred_fallthru
          _
        // Predicated region
        $region49: #{tpu_custom_call.1} parent=35 // pred_check
          %p751 = pneg %p165
        $region50: #{tpu_custom_call.1} parent=35 // pred_check_branch
          %753 = sbr.rel (%p751) target = $region52
        $region51: #{tpu_custom_call.1} parent=35 // pred_region
          %s754 = smul.u32 2, %s27
          %756 = vsyncadd %s730, 0
          %s757 = smul.addr %s754, 8
          %s758 = scalar_lea.hbm %s5, %s757
          %s760 = sshll.u32 %s733, 4
          %s761 = int_to_ptr.vmem [resolvable:$true] %s760
          %s762 = sshll.u32 %s758, 4
          %s763 = int_to_ptr.hbm [resolvable:$true] %s762
          %765 = dma.vmem_to_hbm [thread:$0]  %s761, 256, %s763, %s730
        $region52: #{tpu_custom_call.1} parent=35 // pred_fallthru
          _
      $region36: #{tpu_custom_call.1} parent=5 // pred_fallthru
        _
      %p766 = scmp.le.s32.totalorder 2, %s22
      // Predicated region
      $region53: #{tpu_custom_call.1} parent=5 // pred_check
        %p767 = pneg %p766
      $region54: #{tpu_custom_call.1} parent=5 // pred_check_branch
        %769 = sbr.rel (%p767) target = $region56
      $region55: #{tpu_custom_call.1} parent=5 // pred_region
        %s770 = ssub.s32 %s22, 2
        // Predicated region
        $region57: #{tpu_custom_call.1} parent=55 // pred_check
          %p771 = pneg %p145
        $region58: #{tpu_custom_call.1} parent=55 // pred_check_branch
          %773 = sbr.rel (%p771) target = $region60
        $region59: #{tpu_custom_call.1} parent=55 // pred_region
          %s774 = sand.u32 %s130, 1
          %s775 = scalar_lea.sflag [#allocation4], %s774
          %s776 = sand.u32 %s130, 1
          %s777 = smul.addr %s776, 32
          %s778 = scalar_lea.vmem [#allocation7], %s777
          %780 = dma.done %s775, 512
        $region60: #{tpu_custom_call.1} parent=55 // pred_fallthru
          _
        // Predicated region
        $region61: #{tpu_custom_call.1} parent=55 // pred_check
          %p781 = pneg %p171
        $region62: #{tpu_custom_call.1} parent=55 // pred_check_branch
          %783 = sbr.rel (%p781) target = $region64
        $region63: #{tpu_custom_call.1} parent=55 // pred_region
          %s784 = sand.u32 %s156, 1
          %s785 = scalar_lea.sflag [#allocation9], %s784
          %s786 = sand.u32 %s156, 1
          %s787 = smul.addr %s786, 16
          %s788 = scalar_lea.vmem [#allocation8], %s787
          %790 = dma.done %s785, 256
        $region64: #{tpu_custom_call.1} parent=55 // pred_fallthru
          _
      $region56: #{tpu_custom_call.1} parent=5 // pred_fallthru
        _
    $region6: #{tpu_custom_call.1} parent=1 // loop_footer
      %s26 = sadd.s32 1, %s22
    $region7: #{tpu_custom_call.1} parent=1 // loop_footer_branch
      %21 = sbr.rel target = $region3
    $region8: #{tpu_custom_call.1} parent=1 // loop_exit
      _
    %791 = vsyncpa [#allocation3], 1
    %s792 = scalar_lea.sflag [#allocation3], 1
    %793 = vsyncpa %s792, 1
    %794 = vsyncpa [#allocation6], 1
    %795 = vsyncpa [#allocation4], 1
    %s796 = scalar_lea.sflag [#allocation4], 1
    %797 = vsyncpa %s796, 1
    %798 = vsyncpa [#allocation9], 1
    %s799 = scalar_lea.sflag [#allocation9], 1
    %800 = vsyncpa %s799, 1

</llo_original>
